<compile_context>
chip_gen: v5e
topology: v5e:2x2
jax: 0.10.0
libtpu: 0.0.40
codegen_flags: <defaults>
</compile_context>

<pallas_src>
import functools

import jax
import jax.numpy as jnp
from jax.experimental import pallas as pl
from jax.experimental.pallas import tpu as pltpu


def _round_up(x, m):
    return (x + m - 1) // m * m


def _cdiv(a, b):
    return -(-a // b)


def _sublane_req(dtype):
    # min second-to-last tile dim: 8 for 4-byte, 16 for 2-byte, 32 for 1-byte
    return max(8, 32 // jnp.dtype(dtype).itemsize)


def _row_weight(p, lam, alpha):
    """Per-row fusion weight from a [tm, C] probability tile (top-2 values).

    Matches torch.topk's sorted top-2 (first-occurrence tie handling).
    """
    C = p.shape[1]
    fir = jnp.max(p, axis=1, keepdims=True)                          # top-1 value
    col = jax.lax.broadcasted_iota(jnp.int32, p.shape, 1)
    first_idx = jnp.min(jnp.where(p == fir, col, C), axis=1, keepdims=True)
    masked = jnp.where(col == first_idx, -jnp.inf, p)                # drop one max
    sec = jnp.max(masked, axis=1, keepdims=True)                     # top-2 value
    return jnp.exp(
        alpha * (lam * jnp.log(fir + 1e-8) + (1.0 - lam) * jnp.log(fir - sec + 1e-8))
    )


def _fusion_kernel(p1_ref, p2_ref, v1_ref, v2_ref, o_ref, b1_ref, *, lam, alpha):
    # Row weights depend only on the prob row tile -> compute them once per
    # row tile (first feature-tile step) and keep beta_v1 resident in VMEM.
    @pl.when(pl.program_id(1) == 0)
    def _():
        w1 = _row_weight(p1_ref[...].astype(jnp.float32), lam, alpha)   # [tm,1]
        w2 = _row_weight(p2_ref[...].astype(jnp.float32), lam, alpha)   # [tm,1]
        b1_ref[...] = w1 / (w1 + w2)                 # exact division (off DMA path)

    v1 = v1_ref[...]
    v2 = v2_ref[...]
    b1 = b1_ref[...].astype(v1.dtype)
    # beta1*v1 + (1-beta1)*v2  rewritten as  v2 + beta1*(v1 - v2)
    o_ref[...] = (v2 + b1 * (v1 - v2)).astype(o_ref.dtype)


def _choose_tiles(N, C, D, prob_dtype, v_dtype):
    """Pick (tm, tn, vmem_limit_bytes) from the per-generation VMEM budget."""
    sub = max(_sublane_req(prob_dtype), _sublane_req(v_dtype))
    pb = jnp.dtype(prob_dtype).itemsize
    vb = jnp.dtype(v_dtype).itemsize
    c_lanes = _round_up(C, 128)          # prob blocks occupy 128-lane multiples in VMEM

    try:
        vmem_cap = int(pltpu.get_tpu_info().vmem_capacity_bytes)
    except Exception:
        vmem_cap = 64 * 1024 * 1024      # conservative (v7x per-core)
    # ~24 MiB working-set budget on v7x (64 MiB VMEM), 48 MiB on v5e/v6e (128 MiB).
    budget = max(8 << 20, min(vmem_cap * 3 // 8, 48 << 20))

    def per_row_bytes(tn):
        # double-buffered: 2 prob blocks + v1/v2/out feature blocks, + (tm,1)
        # f32 scratch (pads to 128 lanes).
        return 2 * (2 * c_lanes * pb + 3 * tn * vb) + 128 * 4

    def tm_for(tn):
        t = budget // per_row_bytes(tn)
        return max(sub, (t // sub) * sub)

    # Prefer full-width feature tiles (fully contiguous HBM DMAs, 1-D grid);
    # fall back to 512-lane column tiles only when that forces tiny row tiles.
    d128 = _round_up(D, 128)
    tn = d128
    tm = tm_for(tn)
    if tm < 256 and d128 > 512:
        tn = 512
        tm = tm_for(tn)
    tm = min(tm, 8192)

    # Clamp to the (sublane-rounded) row count; keep >= 2 row tiles when there
    # are enough rows and prefer an EVEN tile count so both v7x TensorCores get
    # equal work on the "parallel" row axis.
    rows = _round_up(N, sub)
    tm = min(tm, rows)
    n_tiles = _cdiv(N, tm)
    target = n_tiles
    if target == 1 and rows >= 2 * sub:
        target = 2
    if target > 1 and target % 2 == 1:
        target += 1
    if target != n_tiles:
        tm = max(sub, _round_up(_cdiv(N, target), sub))

    used = tm * per_row_bytes(tn) + (4 << 20)
    vmem_limit = max(32 << 20, min(int(vmem_cap * 7 // 8), used + (8 << 20)))
    return tm, tn, int(vmem_limit)


def fusion_forward(v1, prob_v1, v2, prob_v2, *, lam, alpha, name="citeseer"):
    """JAX/Pallas equivalent of Fusion.forward (dense result).

    v*      : [N, D] feature matrices
    prob_v* : [N, C] class-probability matrices
    Returns : [N, D] dense fused features.
    """
    # TODO(synk): torch .to_sparse() / torch.sparse.mm wrappers have no Pallas
    # equivalent; the dense fused values are identical for every `name`.
    del name
    N, D = v1.shape
    C = prob_v1.shape[1]

    tm, tn, vmem_limit = _choose_tiles(N, C, D, prob_v1.dtype, v1.dtype)
    grid = (_cdiv(N, tm), _cdiv(D, tn))

    kernel = functools.partial(_fusion_kernel, lam=float(lam), alpha=float(alpha))
    out = pl.pallas_call(
        kernel,
        out_shape=jax.ShapeDtypeStruct((N, D), v1.dtype),
        grid_spec=pltpu.PrefetchScalarGridSpec(
            num_scalar_prefetch=0,
            grid=grid,
            in_specs=[
                pl.BlockSpec((tm, C), lambda i, j: (i, 0)),   # prob_v1 (resident over j)
                pl.BlockSpec((tm, C), lambda i, j: (i, 0)),   # prob_v2 (resident over j)
                pl.BlockSpec((tm, tn), lambda i, j: (i, j)),  # v1 tile
                pl.BlockSpec((tm, tn), lambda i, j: (i, j)),  # v2 tile
            ],
            out_specs=pl.BlockSpec((tm, tn), lambda i, j: (i, j)),
            scratch_shapes=[
                pltpu.VMEM((tm, 1), jnp.float32),             # beta_v1
            ],
        ),
        compiler_params=pltpu.CompilerParams(
            dimension_semantics=("parallel", "arbitrary"),
            vmem_limit_bytes=vmem_limit,
        ),
    )(prob_v1, prob_v2, v1, v2)

    return out


def fusion_reference(v1, prob_v1, v2, prob_v2, *, lam, alpha):
    def get_w(prob):
        top2 = jax.lax.top_k(prob, 2)[0]
        fir, sec = top2[:, 0], top2[:, 1]
        return jnp.exp(
            alpha * (lam * jnp.log(fir + 1e-8) + (1 - lam) * jnp.log(fir - sec + 1e-8))
        )

    w1 = get_w(prob_v1)
    w2 = get_w(prob_v2)
    b1 = (w1 / (w1 + w2))[:, None]
    b2 = (w2 / (w1 + w2))[:, None]
    return b1 * v1 + b2 * v2


if __name__ == "__main__":
    key = jax.random.PRNGKey(0)
    lam, alpha = 0.5, 1.0

    # Case 1: small aligned shapes (nodes, classes, feature dim).
    # Case 2: ragged shapes exercising partial (non-divisible) edge blocks.
    for (N, C, D) in [(16, 8, 32), (19, 6, 50)]:
        k1, k2, k3, k4, key = jax.random.split(key, 5)
        prob_v1 = jax.nn.softmax(jax.random.normal(k1, (N, C), jnp.float32), axis=-1)
        prob_v2 = jax.nn.softmax(jax.random.normal(k2, (N, C), jnp.float32), axis=-1)
        v1 = jax.random.normal(k3, (N, D), jnp.float32)
        v2 = jax.random.normal(k4, (N, D), jnp.float32)

        out = fusion_forward(v1, prob_v1, v2, prob_v2, lam=lam, alpha=alpha,
                             name="citeseer")
        out = jax.block_until_ready(out)

        ref = fusion_reference(v1, prob_v1, v2, prob_v2, lam=lam, alpha=alpha)
        assert out.shape == (N, D)
        assert jnp.allclose(out, ref, atol=1e-5, rtol=1e-5), \
            f"mismatch vs reference for shape N={N}, C={C}, D={D}"

    print("KERNEL_OK")
</pallas_src>

<mosaic_0001>
module attributes {stable_mosaic.version = 11 : i64} {
  func.func @_fusion_kernel(%arg0: i32, %arg1: i32, %arg2: memref<8x8xf32, #tpu.memory_space<vmem>>, %arg3: memref<8x8xf32, #tpu.memory_space<vmem>>, %arg4: memref<8x128xf32, #tpu.memory_space<vmem>>, %arg5: memref<8x128xf32, #tpu.memory_space<vmem>>, %arg6: memref<8x128xf32, #tpu.memory_space<vmem>>, %arg7: memref<8x1xf32, #tpu.memory_space<vmem>>) attributes {dimension_semantics = [#tpu.dimension_semantics<parallel>, #tpu.dimension_semantics<arbitrary>], iteration_bounds = array<i64: 2, 1>, scalar_prefetch = 0 : i64, scratch_operands = 1 : i64, tpu.core_type = #tpu.core_type<tc>, window_params = [{transform_indices = @transform_0, window_bounds = array<i64: 8, 8>}, {transform_indices = @transform_1, window_bounds = array<i64: 8, 8>}, {transform_indices = @transform_2, window_bounds = array<i64: 8, 128>}, {transform_indices = @transform_3, window_bounds = array<i64: 8, 128>}, {transform_indices = @transform_4, window_bounds = array<i64: 8, 128>}]} {
    %c0_i32 = arith.constant 0 : i32
    %0 = arith.cmpi eq, %arg1, %c0_i32 : i32
    %1 = arith.extui %0 : i1 to i32
    %c0_i32_0 = arith.constant 0 : i32
    %2 = arith.cmpi ne, %1, %c0_i32_0 : i32
    scf.if %2 {
      %c0_8 = arith.constant 0 : index
      %c0_9 = arith.constant 0 : index
      %11 = vector.load %arg2[%c0_8, %c0_9] : memref<8x8xf32, #tpu.memory_space<vmem>>, vector<8x8xf32>
      %cst = arith.constant dense<0xFF800000> : vector<8xf32>
      %12 = vector.multi_reduction <maximumf>, %11, %cst [1] : vector<8x8xf32> to vector<8xf32>
      %13 = vector.shape_cast %12 : vector<8xf32> to vector<8x1xf32>
      %14 = tpu.iota {dimensions = array<i32: 1>} : vector<8x8xi32>
      %15 = vector.broadcast %13 : vector<8x1xf32> to vector<8x8xf32>
      %16 = arith.cmpf oeq, %11, %15 : vector<8x8xf32>
      %c8_i32 = arith.constant 8 : i32
      %17 = vector.broadcast %c8_i32 : i32 to vector<8x8xi32>
      %18 = arith.select %16, %14, %17 : vector<8x8xi1>, vector<8x8xi32>
      %cst_10 = arith.constant dense<2147483647> : vector<8xi32>
      %19 = vector.multi_reduction <minsi>, %18, %cst_10 [1] : vector<8x8xi32> to vector<8xi32>
      %20 = vector.shape_cast %19 : vector<8xi32> to vector<8x1xi32>
      %21 = vector.broadcast %20 : vector<8x1xi32> to vector<8x8xi32>
      %22 = arith.cmpi eq, %14, %21 : vector<8x8xi32>
      %cst_11 = arith.constant 0xFF800000 : f32
      %23 = vector.broadcast %cst_11 : f32 to vector<8x8xf32>
      %24 = arith.select %22, %23, %11 : vector<8x8xi1>, vector<8x8xf32>
      %cst_12 = arith.constant dense<0xFF800000> : vector<8xf32>
      %25 = vector.multi_reduction <maximumf>, %24, %cst_12 [1] : vector<8x8xf32> to vector<8xf32>
      %26 = vector.shape_cast %25 : vector<8xf32> to vector<8x1xf32>
      %cst_13 = arith.constant 9.99999993E-9 : f32
      %27 = vector.broadcast %cst_13 : f32 to vector<8x1xf32>
      %28 = arith.addf %13, %27 : vector<8x1xf32>
      %29 = math.log %28 : vector<8x1xf32>
      %cst_14 = arith.constant 5.000000e-01 : f32
      %30 = vector.broadcast %cst_14 : f32 to vector<8x1xf32>
      %31 = arith.mulf %30, %29 : vector<8x1xf32>
      %32 = arith.subf %13, %26 : vector<8x1xf32>
      %cst_15 = arith.constant 9.99999993E-9 : f32
      %33 = vector.broadcast %cst_15 : f32 to vector<8x1xf32>
      %34 = arith.addf %32, %33 : vector<8x1xf32>
      %35 = math.log %34 : vector<8x1xf32>
      %cst_16 = arith.constant 5.000000e-01 : f32
      %36 = vector.broadcast %cst_16 : f32 to vector<8x1xf32>
      %37 = arith.mulf %36, %35 : vector<8x1xf32>
      %38 = arith.addf %31, %37 : vector<8x1xf32>
      %cst_17 = arith.constant 1.000000e+00 : f32
      %39 = vector.broadcast %cst_17 : f32 to vector<8x1xf32>
      %40 = arith.mulf %39, %38 : vector<8x1xf32>
      %41 = math.exp %40 : vector<8x1xf32>
      %c0_18 = arith.constant 0 : index
      %c0_19 = arith.constant 0 : index
      %42 = vector.load %arg3[%c0_18, %c0_19] : memref<8x8xf32, #tpu.memory_space<vmem>>, vector<8x8xf32>
      %cst_20 = arith.constant dense<0xFF800000> : vector<8xf32>
      %43 = vector.multi_reduction <maximumf>, %42, %cst_20 [1] : vector<8x8xf32> to vector<8xf32>
      %44 = vector.shape_cast %43 : vector<8xf32> to vector<8x1xf32>
      %45 = tpu.iota {dimensions = array<i32: 1>} : vector<8x8xi32>
      %46 = vector.broadcast %44 : vector<8x1xf32> to vector<8x8xf32>
      %47 = arith.cmpf oeq, %42, %46 : vector<8x8xf32>
      %c8_i32_21 = arith.constant 8 : i32
      %48 = vector.broadcast %c8_i32_21 : i32 to vector<8x8xi32>
      %49 = arith.select %47, %45, %48 : vector<8x8xi1>, vector<8x8xi32>
      %cst_22 = arith.constant dense<2147483647> : vector<8xi32>
      %50 = vector.multi_reduction <minsi>, %49, %cst_22 [1] : vector<8x8xi32> to vector<8xi32>
      %51 = vector.shape_cast %50 : vector<8xi32> to vector<8x1xi32>
      %52 = vector.broadcast %51 : vector<8x1xi32> to vector<8x8xi32>
      %53 = arith.cmpi eq, %45, %52 : vector<8x8xi32>
      %cst_23 = arith.constant 0xFF800000 : f32
      %54 = vector.broadcast %cst_23 : f32 to vector<8x8xf32>
      %55 = arith.select %53, %54, %42 : vector<8x8xi1>, vector<8x8xf32>
      %cst_24 = arith.constant dense<0xFF800000> : vector<8xf32>
      %56 = vector.multi_reduction <maximumf>, %55, %cst_24 [1] : vector<8x8xf32> to vector<8xf32>
      %57 = vector.shape_cast %56 : vector<8xf32> to vector<8x1xf32>
      %cst_25 = arith.constant 9.99999993E-9 : f32
      %58 = vector.broadcast %cst_25 : f32 to vector<8x1xf32>
      %59 = arith.addf %44, %58 : vector<8x1xf32>
      %60 = math.log %59 : vector<8x1xf32>
      %cst_26 = arith.constant 5.000000e-01 : f32
      %61 = vector.broadcast %cst_26 : f32 to vector<8x1xf32>
      %62 = arith.mulf %61, %60 : vector<8x1xf32>
      %63 = arith.subf %44, %57 : vector<8x1xf32>
      %cst_27 = arith.constant 9.99999993E-9 : f32
      %64 = vector.broadcast %cst_27 : f32 to vector<8x1xf32>
      %65 = arith.addf %63, %64 : vector<8x1xf32>
      %66 = math.log %65 : vector<8x1xf32>
      %cst_28 = arith.constant 5.000000e-01 : f32
      %67 = vector.broadcast %cst_28 : f32 to vector<8x1xf32>
      %68 = arith.mulf %67, %66 : vector<8x1xf32>
      %69 = arith.addf %62, %68 : vector<8x1xf32>
      %cst_29 = arith.constant 1.000000e+00 : f32
      %70 = vector.broadcast %cst_29 : f32 to vector<8x1xf32>
      %71 = arith.mulf %70, %69 : vector<8x1xf32>
      %72 = math.exp %71 : vector<8x1xf32>
      %73 = arith.addf %41, %72 : vector<8x1xf32>
      %74 = arith.divf %41, %73 : vector<8x1xf32>
      %c0_30 = arith.constant 0 : index
      %c0_31 = arith.constant 0 : index
      %75 = vector.load %arg7[%c0_30, %c0_31] : memref<8x1xf32, #tpu.memory_space<vmem>>, vector<8x1xf32>
      tpu.vector_store %arg7[%c0_30, %c0_31], %74 {strides = array<i32>} : memref<8x1xf32, #tpu.memory_space<vmem>>, vector<8x1xf32>,
    } else {
    }
    %c0 = arith.constant 0 : index
    %c0_1 = arith.constant 0 : index
    %3 = vector.load %arg4[%c0, %c0_1] : memref<8x128xf32, #tpu.memory_space<vmem>>, vector<8x128xf32>
    %c0_2 = arith.constant 0 : index
    %c0_3 = arith.constant 0 : index
    %4 = vector.load %arg5[%c0_2, %c0_3] : memref<8x128xf32, #tpu.memory_space<vmem>>, vector<8x128xf32>
    %c0_4 = arith.constant 0 : index
    %c0_5 = arith.constant 0 : index
    %5 = vector.load %arg7[%c0_4, %c0_5] : memref<8x1xf32, #tpu.memory_space<vmem>>, vector<8x1xf32>
    %6 = arith.subf %3, %4 : vector<8x128xf32>
    %7 = vector.broadcast %5 : vector<8x1xf32> to vector<8x128xf32>
    %8 = arith.mulf %7, %6 : vector<8x128xf32>
    %9 = arith.addf %4, %8 : vector<8x128xf32>
    %c0_6 = arith.constant 0 : index
    %c0_7 = arith.constant 0 : index
    %10 = vector.load %arg6[%c0_6, %c0_7] : memref<8x128xf32, #tpu.memory_space<vmem>>, vector<8x128xf32>
    tpu.vector_store %arg6[%c0_6, %c0_7], %9 {strides = array<i32>} : memref<8x128xf32, #tpu.memory_space<vmem>>, vector<8x128xf32>,
    return
  }
  func.func @transform_0(%arg0: i32, %arg1: i32) -> (i32, i32) {
    %c0_i32 = arith.constant 0 : i32
    %c0_i32_0 = arith.constant 0 : i32
    return %arg0, %c0_i32 : i32, i32
  }
  func.func @transform_1(%arg0: i32, %arg1: i32) -> (i32, i32) {
    %c0_i32 = arith.constant 0 : i32
    %c0_i32_0 = arith.constant 0 : i32
    return %arg0, %c0_i32 : i32, i32
  }
  func.func @transform_2(%arg0: i32, %arg1: i32) -> (i32, i32) {
    %c0_i32 = arith.constant 0 : i32
    return %arg0, %arg1 : i32, i32
  }
  func.func @transform_3(%arg0: i32, %arg1: i32) -> (i32, i32) {
    %c0_i32 = arith.constant 0 : i32
    return %arg0, %arg1 : i32, i32
  }
  func.func @transform_4(%arg0: i32, %arg1: i32) -> (i32, i32) {
    %c0_i32 = arith.constant 0 : i32
    return %arg0, %arg1 : i32, i32
  }
}

</mosaic_0001>

<llo_original>
// kernel: tpu_custom_call.1
$region0: #{tpu_custom_call.1}
  #allocation0 [shape = 'u32[]', space=smem, size = 0x4, offset = 0x4, fixed_abs, tag = 'smem constant byte address 0x4 - core index']
  #allocation1 [shape = 'u32[72,128]{1,0:T(1,128)}', space=vmem, size = 0x9000, scoped, tag = 'internal scratch']
  #allocation2 [shape = 'f32[8,1]{1,0:T(8,128)}', space=vmem, size = 0x1000, scoped, tag = 'scratch operand']
  %s0 = inlined_call_operand.vmem [shape: f32[16,8], index: 0, kind: input, shape index: {}]
  %s1 = inlined_call_operand.vmem [shape: f32[16,8], index: 1, kind: input, shape index: {}]
  %s2 = inlined_call_operand.vmem [shape: f32[16,32], index: 2, kind: input, shape index: {}]
  %s3 = inlined_call_operand.vmem [shape: f32[16,32], index: 3, kind: input, shape index: {}]
  %s4 = inlined_call_operand.hbm [shape: f32[16,32], index: 4, kind: output, shape index: {}]
  %s5 = sld [smem:[#allocation0]]
  $region53: #{tpu_custom_call.1} parent=0
    _
  %s7 = ssub.s32 1, %s5
  %s8 = scalar_select 0, %s7, %s5
  $region1: #{tpu_custom_call.1} parent=0
    #allocation3 [shape = 'u8[8192]{0}', space=vmem, size = 0x2000, scoped, tag = 'output window, operand 0']
    #allocation4 [shape = 's32[2]{0}', space=sflag, size = 0x8, scoped, tag = 'scoped memory for tpu_custom_call.1']
    %9 = vsyncpa [#allocation4], 0
    %s10 = scalar_lea.sflag [#allocation4], 1
    %11 = vsyncpa %s10, 0
    loop: start=0, step=1, limit=4
    $region2: #{tpu_custom_call.1} parent=1 // loop_pre_header
      _
    $region3: #{tpu_custom_call.1} parent=1 // loop_header
      %s13 = sphi 0, %s17
      %p14 = scmp.ge.s32.totalorder %s13, 4
      %s20 = sphi 0, %s32
      %s21 = sphi 0, %s28
      %s22 = sphi 0, %s20
      %s23 = sphi 0, %s21
      %s24 = sphi 0, %s22
      %s25 = sphi 0, %s23
      %s35 = sphi 0, %s37
      %s38 = sphi 0, %s35
      %s39 = sphi 0, %s38
      %s55 = sphi 0, %s39
      %s61 = sphi 0, %s63
      %s64 = sphi 0, %s61
      %s65 = sphi 0, %s64
      %s81 = sphi 0, %s65
      %s89 = sphi 0, %s91
      %s92 = sphi 0, %s89
      %s93 = sphi 0, %s92
      %s109 = sphi 0, %s93
      %s117 = sphi 0, %s119
      %s120 = sphi 0, %s117
      %s121 = sphi 0, %s120
      %s137 = sphi 0, %s121
      %s145 = sphi 0, %s147
      %s148 = sphi 0, %s145
      %s149 = sphi 0, %s148
      %s165 = sphi 0, %s149
    $region4: #{tpu_custom_call.1} parent=1 // loop_header_branch
      %16 = sbr.rel (%p14) target = $region8
    $region5: #{tpu_custom_call.1} parent=1 // loop_body
      %s18 = ssub.s32 %s13, 1
      %s19 = ssub.s32 %s13, 2
      %s26 = sadd.s32 1, %s21
      %p27 = scmp.ge.s32.totalorder %s26, 1
      %s28 = scalar_select %p27, 0, %s26
      %s29 = sadd.s32 1, %s20
      %s30 = scalar_select %p27, %s29, %s20
      %p31 = scmp.ge.s32.totalorder %s30, 2
      %s32 = scalar_select %p31, 0, %s30
      %s33 = ssub.s32 %s20, %s32
      %p34 = scmp.eq.s32.totalorder %s33, 0
      %s36 = sadd.s32 %s35, 1
      %s37 = scalar_select %p34, %s35, %s36
      %p40 = pneg %p34
      %p41 = scmp.eq.s32.totalorder %s13, 1
      %p42 = por %p40, %p41
      %p43 = scmp.ne.s32.totalorder %s35, %s38
      %p44 = scmp.eq.s32.totalorder %s13, 0
      %p45 = por %p43, %p44
      %p46 = scmp.ne.s32.totalorder %s35, %s38
      %p47 = scmp.eq.s32.totalorder %s18, 1
      %p48 = por %p46, %p47
      %p49 = scmp.ne.s32.totalorder %s38, %s39
      %p50 = scmp.eq.s32.totalorder %s18, 0
      %p51 = por %p49, %p50
      %p52 = scmp.ne.s32.totalorder %s38, %s39
      %p53 = scmp.eq.s32.totalorder %s19, 1
      %p54 = por %p52, %p53
      %p56 = scmp.ne.s32.totalorder %s39, %s55
      %p57 = scmp.eq.s32.totalorder %s19, 0
      %p58 = por %p56, %p57
      %s59 = ssub.s32 %s20, %s32
      %p60 = scmp.eq.s32.totalorder %s59, 0
      %s62 = sadd.s32 %s61, 1
      %s63 = scalar_select %p60, %s61, %s62
      %p66 = pneg %p60
      %p67 = scmp.eq.s32.totalorder %s13, 1
      %p68 = por %p66, %p67
      %p69 = scmp.ne.s32.totalorder %s61, %s64
      %p70 = scmp.eq.s32.totalorder %s13, 0
      %p71 = por %p69, %p70
      %p72 = scmp.ne.s32.totalorder %s61, %s64
      %p73 = scmp.eq.s32.totalorder %s18, 1
      %p74 = por %p72, %p73
      %p75 = scmp.ne.s32.totalorder %s64, %s65
      %p76 = scmp.eq.s32.totalorder %s18, 0
      %p77 = por %p75, %p76
      %p78 = scmp.ne.s32.totalorder %s64, %s65
      %p79 = scmp.eq.s32.totalorder %s19, 1
      %p80 = por %p78, %p79
      %p82 = scmp.ne.s32.totalorder %s65, %s81
      %p83 = scmp.eq.s32.totalorder %s19, 0
      %p84 = por %p82, %p83
      %s85 = ssub.s32 %s20, %s32
      %s86 = ssub.s32 %s21, %s28
      %s87 = sor.u32 %s85, %s86
      %p88 = scmp.eq.s32.totalorder %s87, 0
      %s90 = sadd.s32 %s89, 1
      %s91 = scalar_select %p88, %s89, %s90
      %p94 = pneg %p88
      %p95 = scmp.eq.s32.totalorder %s13, 1
      %p96 = por %p94, %p95
      %p97 = scmp.ne.s32.totalorder %s89, %s92
      %p98 = scmp.eq.s32.totalorder %s13, 0
      %p99 = por %p97, %p98
      %p100 = scmp.ne.s32.totalorder %s89, %s92
      %p101 = scmp.eq.s32.totalorder %s18, 1
      %p102 = por %p100, %p101
      %p103 = scmp.ne.s32.totalorder %s92, %s93
      %p104 = scmp.eq.s32.totalorder %s18, 0
      %p105 = por %p103, %p104
      %p106 = scmp.ne.s32.totalorder %s92, %s93
      %p107 = scmp.eq.s32.totalorder %s19, 1
      %p108 = por %p106, %p107
      %p110 = scmp.ne.s32.totalorder %s93, %s109
      %p111 = scmp.eq.s32.totalorder %s19, 0
      %p112 = por %p110, %p111
      %s113 = ssub.s32 %s20, %s32
      %s114 = ssub.s32 %s21, %s28
      %s115 = sor.u32 %s113, %s114
      %p116 = scmp.eq.s32.totalorder %s115, 0
      %s118 = sadd.s32 %s117, 1
      %s119 = scalar_select %p116, %s117, %s118
      %p122 = pneg %p116
      %p123 = scmp.eq.s32.totalorder %s13, 1
      %p124 = por %p122, %p123
      %p125 = scmp.ne.s32.totalorder %s117, %s120
      %p126 = scmp.eq.s32.totalorder %s13, 0
      %p127 = por %p125, %p126
      %p128 = scmp.ne.s32.totalorder %s117, %s120
      %p129 = scmp.eq.s32.totalorder %s18, 1
      %p130 = por %p128, %p129
      %p131 = scmp.ne.s32.totalorder %s120, %s121
      %p132 = scmp.eq.s32.totalorder %s18, 0
      %p133 = por %p131, %p132
      %p134 = scmp.ne.s32.totalorder %s120, %s121
      %p135 = scmp.eq.s32.totalorder %s19, 1
      %p136 = por %p134, %p135
      %p138 = scmp.ne.s32.totalorder %s121, %s137
      %p139 = scmp.eq.s32.totalorder %s19, 0
      %p140 = por %p138, %p139
      %s141 = ssub.s32 %s20, %s32
      %s142 = ssub.s32 %s21, %s28
      %s143 = sor.u32 %s141, %s142
      %p144 = scmp.eq.s32.totalorder %s143, 0
      %s146 = sadd.s32 %s145, 1
      %s147 = scalar_select %p144, %s145, %s146
      %p150 = pneg %p144
      %p151 = scmp.eq.s32.totalorder %s13, 1
      %p152 = por %p150, %p151
      %p153 = scmp.ne.s32.totalorder %s145, %s148
      %p154 = scmp.eq.s32.totalorder %s13, 0
      %p155 = por %p153, %p154
      %p156 = scmp.ne.s32.totalorder %s145, %s148
      %p157 = scmp.eq.s32.totalorder %s18, 1
      %p158 = por %p156, %p157
      %p159 = scmp.ne.s32.totalorder %s148, %s149
      %p160 = scmp.eq.s32.totalorder %s18, 0
      %p161 = por %p159, %p160
      %p162 = scmp.ne.s32.totalorder %s148, %s149
      %p163 = scmp.eq.s32.totalorder %s19, 1
      %p164 = por %p162, %p163
      %p166 = scmp.ne.s32.totalorder %s149, %s165
      %p167 = scmp.eq.s32.totalorder %s19, 0
      %p168 = por %p166, %p167
      %p169 = scmp.le.s32.totalorder 1, %s13
      %p170 = scmp.lt.s32.totalorder %s13, 3
      %p171 = pnand %p169, %p170
      %p172 = pneg %p171
      // Predicated region
      $region9: #{tpu_custom_call.1} parent=5 // pred_check
        _
      $region10: #{tpu_custom_call.1} parent=5 // pred_check_branch
        %174 = sbr.rel (%p171) target = $region12
      $region11: #{tpu_custom_call.1} parent=5 // pred_region
        %s175 = ssub.s32 %s13, 1
      $region12: #{tpu_custom_call.1} parent=5 // pred_fallthru
        _
      %p176 = scmp.lt.s32.totalorder %s13, 2
      // Predicated region
      $region13: #{tpu_custom_call.1} parent=5 // pred_check
        %p177 = pneg %p176
      $region14: #{tpu_custom_call.1} parent=5 // pred_check_branch
        %179 = sbr.rel (%p177) target = $region16
      $region15: #{tpu_custom_call.1} parent=5 // pred_region
        // Predicated region
        $region17: #{tpu_custom_call.1} parent=15 // pred_check
          %p180 = pneg %p45
        $region18: #{tpu_custom_call.1} parent=15 // pred_check_branch
          %182 = sbr.rel (%p180) target = $region20
        $region19: #{tpu_custom_call.1} parent=15 // pred_region
          %p183 = scmp.lt.s32.totalorder %s20, 1
          %s184 = scalar_select %p183, %s20, 1
          %s185 = smul.addr %s184, 8
          %s186 = scalar_lea.vmem %s0, %s185
        $region20: #{tpu_custom_call.1} parent=15 // pred_fallthru
          _
        // Predicated region
        $region21: #{tpu_custom_call.1} parent=15 // pred_check
          %p187 = pneg %p71
        $region22: #{tpu_custom_call.1} parent=15 // pred_check_branch
          %189 = sbr.rel (%p187) target = $region24
        $region23: #{tpu_custom_call.1} parent=15 // pred_region
          %p190 = scmp.lt.s32.totalorder %s20, 1
          %s191 = scalar_select %p190, %s20, 1
          %s192 = smul.addr %s191, 8
          %s193 = scalar_lea.vmem %s1, %s192
        $region24: #{tpu_custom_call.1} parent=15 // pred_fallthru
          _
        // Predicated region
        $region25: #{tpu_custom_call.1} parent=15 // pred_check
          %p194 = pneg %p99
        $region26: #{tpu_custom_call.1} parent=15 // pred_check_branch
          %196 = sbr.rel (%p194) target = $region28
        $region27: #{tpu_custom_call.1} parent=15 // pred_region
          %p197 = scmp.lt.s32.totalorder %s20, 1
          %s198 = scalar_select %p197, %s20, 1
          %p199 = scmp.lt.s32.totalorder %s21, 0
          %s200 = scalar_select %p199, %s21, 0
          %s201 = sadd.s32 %s200, %s198
          %s202 = smul.addr %s201, 8
          %s203 = scalar_lea.vmem %s2, %s202
        $region28: #{tpu_custom_call.1} parent=15 // pred_fallthru
          _
        // Predicated region
        $region29: #{tpu_custom_call.1} parent=15 // pred_check
          %p204 = pneg %p127
        $region30: #{tpu_custom_call.1} parent=15 // pred_check_branch
          %206 = sbr.rel (%p204) target = $region32
        $region31: #{tpu_custom_call.1} parent=15 // pred_region
          %p207 = scmp.lt.s32.totalorder %s20, 1
          %s208 = scalar_select %p207, %s20, 1
          %p209 = scmp.lt.s32.totalorder %s21, 0
          %s210 = scalar_select %p209, %s21, 0
          %s211 = sadd.s32 %s210, %s208
          %s212 = smul.addr %s211, 8
          %s213 = scalar_lea.vmem %s3, %s212
        $region32: #{tpu_custom_call.1} parent=15 // pred_fallthru
          _
      $region16: #{tpu_custom_call.1} parent=5 // pred_fallthru
        _
      %p214 = scmp.le.s32.totalorder 1, %s13
      %p215 = scmp.lt.s32.totalorder %s13, 3
      %p216 = pnand %p214, %p215
      %p217 = pneg %p216
      // Predicated region
      $region33: #{tpu_custom_call.1} parent=5 // pred_check
        _
      $region34: #{tpu_custom_call.1} parent=5 // pred_check_branch
        %219 = sbr.rel (%p216) target = $region36
      $region35: #{tpu_custom_call.1} parent=5 // pred_region
        %s220 = ssub.s32 %s13, 1
        %p221 = scmp.lt.s32.totalorder %s22, 1
        %s222 = scalar_select %p221, %s22, 1
        %s223 = smul.addr %s222, 8
        %s224 = scalar_lea.vmem %s0, %s223
        %p225 = pneg %p51
        %p226 = pneg %p48
        %p227 = scmp.lt.s32.totalorder %s22, 1
        %s228 = scalar_select %p227, %s22, 1
        %s229 = smul.addr %s228, 8
        %s230 = scalar_lea.vmem %s1, %s229
        %p231 = pneg %p77
        %p232 = pneg %p74
        %p233 = scmp.lt.s32.totalorder %s22, 1
        %s234 = scalar_select %p233, %s22, 1
        %p235 = scmp.lt.s32.totalorder %s23, 0
        %s236 = scalar_select %p235, %s23, 0
        %s237 = sadd.s32 %s236, %s234
        %s238 = smul.addr %s237, 8
        %s239 = scalar_lea.vmem %s2, %s238
        %p240 = pneg %p105
        %p241 = pneg %p102
        %p242 = scmp.lt.s32.totalorder %s22, 1
        %s243 = scalar_select %p242, %s22, 1
        %p244 = scmp.lt.s32.totalorder %s23, 0
        %s245 = scalar_select %p244, %s23, 0
        %s246 = sadd.s32 %s245, %s243
        %s247 = smul.addr %s246, 8
        %s248 = scalar_lea.vmem %s3, %s247
        %p249 = pneg %p133
        %p250 = pneg %p130
        %p251 = pneg %p161
        %p252 = pneg %p158
        %s253 = sand.u32 %s148, 1
        %s254 = scalar_lea.sflag [#allocation4], %s253
        %s255 = sand.u32 %s148, 1
        %s256 = smul.addr %s255, 8
        %s257 = scalar_lea.vmem [#allocation3], %s256
        %p258 = scmp.lt.s32.totalorder %s22, 1
        %s259 = scalar_select %p258, %s22, 1
        %s260 = smul.addr %s259, 8
        %s261 = scalar_lea.vmem %s0, %s260
        %p262 = scmp.lt.s32.totalorder %s22, 1
        %s263 = scalar_select %p262, %s22, 1
        %s264 = smul.addr %s263, 8
        %s265 = scalar_lea.vmem %s1, %s264
        %p266 = scmp.lt.s32.totalorder %s22, 1
        %s267 = scalar_select %p266, %s22, 1
        %p268 = scmp.lt.s32.totalorder %s23, 0
        %s269 = scalar_select %p268, %s23, 0
        %s270 = sadd.s32 %s269, %s267
        %s271 = smul.addr %s270, 8
        %s272 = scalar_lea.vmem %s2, %s271
        %p273 = scmp.lt.s32.totalorder %s22, 1
        %s274 = scalar_select %p273, %s22, 1
        %p275 = scmp.lt.s32.totalorder %s23, 0
        %s276 = scalar_select %p275, %s23, 0
        %s277 = sadd.s32 %s276, %s274
        %s278 = smul.addr %s277, 8
        %s279 = scalar_lea.vmem %s3, %s278
        %p280 = scmp.eq.s32.totalorder %s23, 0
        // Predicated region
        $region37: #{tpu_custom_call.1} parent=35 // pred_check
          %p281 = pneg %p280
        $region38: #{tpu_custom_call.1} parent=35 // pred_check_branch
          %283 = sbr.rel (%p281) target = $region40
        $region39: #{tpu_custom_call.1} parent=35 // pred_region
          %v284 = vld [vmem:[%s261] sm:$0xff]
          %vm285 = vcmask 64512
          %v286 = vsel %vm285, %v284, -inf
          %287 = vmax.xlane.f32.xlu0 %v286
          %v288 = vpop.xlane.xlu0 %287
          %v289 = vlaneseq
          %v290 = vand.u32 %v289, 127
          %vm291 = vcmp.eq.f32.partialorder %v284, %v288
          %v292 = vsel %vm291, %v290, 8
          %v293 = vsel %vm285, %v292, 2147483647
          %v294 = vand.u32 %v293, 65535
          %v295 = vshra.s32 %v293, 16
          %v296 = vcvt.s32.f32 %v294
          %v297 = vcvt.s32.f32 %v295
          %298 = vmin.xlane.f32.xlu0 %v297
          %v299 = vpop.xlane.xlu0 %298
          %vm300 = vcmp.eq.f32.partialorder %v297, %v299
          %v301 = vsel %vm300, %v296, inf
          %302 = vmin.xlane.f32.xlu0 %v301
          %v303 = vpop.xlane.xlu0 %302
          %v304 = vcvt.f32.s32 %v303
          %v305 = vcvt.f32.s32 %v299
          %v306 = vshll.u32 %v305, 16
          %v307 = vadd.s32 %v306, %v304
          %vm308 = vcmp.eq.s32.totalorder %v290, %v307
          %v309 = vsel %vm308, -inf, %v284
          %v310 = vsel %vm285, %v309, -inf
          %311 = vmax.xlane.f32.xlu0 %v310
          %v312 = vpop.xlane.xlu0 %311
          %v313 = vadd.f32 %v288, 1e-08
          %v314 = vlog2.pop %v313
          %v315 = vmul.f32 %v314, 0.6931472
          %v316 = vmul.f32 %v315, 0.5
          %v317 = vsub.f32 %v288, %v312
          %v318 = vadd.f32 %v317, 1e-08
          %v319 = vlog2.pop %v318
          %v320 = vmul.f32 %v319, 0.6931472
          %v321 = vmul.f32 %v320, 0.5
          %v322 = vadd.f32 %v316, %v321
          %v323 = vmul.f32 %v322, 1.442695
          %v324 = vpow.pop %v323
          %v325 = vld [vmem:[%s265] sm:$0xff]
          %v326 = vsel %vm285, %v325, -inf
          %327 = vmax.xlane.f32.xlu0 %v326
          %v328 = vpop.xlane.xlu0 %327
          %vm329 = vcmp.eq.f32.partialorder %v325, %v328
          %v330 = vsel %vm329, %v290, 8
          %v331 = vsel %vm285, %v330, 2147483647
          %v332 = vand.u32 %v331, 65535
          %v333 = vshra.s32 %v331, 16
          %v334 = vcvt.s32.f32 %v332
          %v335 = vcvt.s32.f32 %v333
          %336 = vmin.xlane.f32.xlu0 %v335
          %v337 = vpop.xlane.xlu0 %336
          %vm338 = vcmp.eq.f32.partialorder %v335, %v337
          %v339 = vsel %vm338, %v334, inf
          %340 = vmin.xlane.f32.xlu0 %v339
          %v341 = vpop.xlane.xlu0 %340
          %v342 = vcvt.f32.s32 %v341
          %v343 = vcvt.f32.s32 %v337
          %v344 = vshll.u32 %v343, 16
          %v345 = vadd.s32 %v344, %v342
          %vm346 = vcmp.eq.s32.totalorder %v290, %v345
          %v347 = vsel %vm346, -inf, %v325
          %v348 = vsel %vm285, %v347, -inf
          %349 = vmax.xlane.f32.xlu0 %v348
          %v350 = vpop.xlane.xlu0 %349
          %v351 = vadd.f32 %v328, 1e-08
          %v352 = vlog2.pop %v351
          %v353 = vmul.f32 %v352, 0.6931472
          %v354 = vmul.f32 %v353, 0.5
          %v355 = vsub.f32 %v328, %v350
          %v356 = vadd.f32 %v355, 1e-08
          %v357 = vlog2.pop %v356
          %v358 = vmul.f32 %v357, 0.6931472
          %v359 = vmul.f32 %v358, 0.5
          %v360 = vadd.f32 %v354, %v359
          %v361 = vmul.f32 %v360, 1.442695
          %v362 = vpow.pop %v361
          %v363 = vadd.f32 %v324, %v362
          %v364 = vrcp.pop %v363
          %v365 = vmul.f32 %v363, %v364
          %v366 = vsub.f32 1.0, %v365
          %v367 = vmul.f32 %v364, %v366
          %v368 = vadd.f32 %v364, %v367
          %vm369 = vweird.f32 %v363
          %vm370 = vweird.f32 %v364
          %vm371 = vmor %vm369, %vm370
          %v372 = vsel %vm371, %v364, %v368
          %v373 = vand.u32 2147483647, %v363
          %vm374 = vcmp.eq.f32.partialorder %v373, 8.507059e+37
          %v375 = vand.u32 %v363, 2147483648
          %v376 = vor.u32 1.1754944e-38, %v375
          %v377 = vsel %vm374, %v376, %v372
          %v378 = vmul.f32 %v324, %v377
          %vm379 = vcmask 7168
          %380 = vst.msk [vmem:[#allocation2] sm:$0xff] %vm379, %v378
        $region40: #{tpu_custom_call.1} parent=35 // pred_fallthru
          _
        %v381 = vld [vmem:[%s272] sm:$0xff]
        %v382 = vld [vmem:[%s279] sm:$0xff]
        %v383 = vld [vmem:[#allocation2] sm:$0xff]
        %v384 = vsub.f32 %v381, %v382
        %386 = vset.pattern.permute.xlu0 0
        %387 = vperm.xlu0 %386, %v383
        %v388 = vpop.permute.xlu0 %387
        %v390 = vmul.f32 %v388, %v384
        %v391 = vadd.f32 %v382, %v390
        %392 = vst [vmem:[%s257] sm:$0xff] %v391
        %s393 = sand.u32 %s148, 1
        %s394 = scalar_lea.sflag [#allocation4], %s393
        %s395 = sand.u32 %s148, 1
        %s396 = smul.addr %s395, 8
        %s397 = scalar_lea.vmem [#allocation3], %s396
        // Predicated region
        $region41: #{tpu_custom_call.1} parent=35 // pred_check
          %p398 = pneg %p158
        $region42: #{tpu_custom_call.1} parent=35 // pred_check_branch
          %400 = sbr.rel (%p398) target = $region44
        $region43: #{tpu_custom_call.1} parent=35 // pred_region
          %402 = vsyncadd %s394, 0
          %s403 = sadd.s32 %s23, %s22
          %s404 = smul.addr %s403, 8
          %s405 = scalar_lea.hbm %s4, %s404
          %s407 = sshll.u32 %s397, 4
          %s408 = int_to_ptr.vmem [resolvable:$true] %s407
          %s409 = sshll.u32 %s405, 4
          %s410 = int_to_ptr.hbm [resolvable:$true] %s409
          %412 = dma.vmem_to_hbm [thread:$0]  %s408, 128, %s410, %s394
        $region44: #{tpu_custom_call.1} parent=35 // pred_fallthru
          _
      $region36: #{tpu_custom_call.1} parent=5 // pred_fallthru
        _
      %p413 = scmp.le.s32.totalorder 2, %s13
      // Predicated region
      $region45: #{tpu_custom_call.1} parent=5 // pred_check
        %p414 = pneg %p413
      $region46: #{tpu_custom_call.1} parent=5 // pred_check_branch
        %416 = sbr.rel (%p414) target = $region48
      $region47: #{tpu_custom_call.1} parent=5 // pred_region
        %s417 = ssub.s32 %s13, 2
        // Predicated region
        $region49: #{tpu_custom_call.1} parent=47 // pred_check
          %p418 = pneg %p164
        $region50: #{tpu_custom_call.1} parent=47 // pred_check_branch
          %420 = sbr.rel (%p418) target = $region52
        $region51: #{tpu_custom_call.1} parent=47 // pred_region
          %s421 = sand.u32 %s149, 1
          %s422 = scalar_lea.sflag [#allocation4], %s421
          %s423 = sand.u32 %s149, 1
          %s424 = smul.addr %s423, 8
          %s425 = scalar_lea.vmem [#allocation3], %s424
          %427 = dma.done %s422, 128
        $region52: #{tpu_custom_call.1} parent=47 // pred_fallthru
          _
      $region48: #{tpu_custom_call.1} parent=5 // pred_fallthru
        _
    $region6: #{tpu_custom_call.1} parent=1 // loop_footer
      %s17 = sadd.s32 1, %s13
    $region7: #{tpu_custom_call.1} parent=1 // loop_footer_branch
      %12 = sbr.rel target = $region3
    $region8: #{tpu_custom_call.1} parent=1 // loop_exit
      _
    %428 = vsyncpa [#allocation4], 1
    %s429 = scalar_lea.sflag [#allocation4], 1
    %430 = vsyncpa %s429, 1

</llo_original>
